<compile_context>
chip_gen: v7x
topology: tpu7x:2x2x1
jax: 0.10.0
libtpu: 0.0.40
codegen_flags: <defaults>
</compile_context>

<pallas_src>
import functools
import math

import jax
import jax.numpy as jnp
from jax.experimental import pallas as pl
from jax.experimental.pallas import tpu as pltpu


def _round_up(x, m):
    return -(-x // m) * m


# ------------------------------ Pallas kernel ------------------------------

def _sft_layer_kernel(cond_ref, fea_ref, w0_ref, b0_ref, ws1_ref, bs1_ref,
                      wt1_ref, bt1_ref, o_ref, *, nb, c_hidden):
    # cond_ref: (nb, 32, thw) f32    fea_ref / o_ref: (nb, 64, thw) f32
    # w0_ref:   (64, 32) bf16  -- merged [scale_conv0; shift_conv0]
    # ws1_ref / wt1_ref: (64, 32) bf16 ; biases are f32 column vectors.
    w0 = w0_ref[...]
    ws1 = ws1_ref[...]
    wt1 = wt1_ref[...]
    b0 = b0_ref[...]
    bs1 = bs1_ref[...]
    bt1 = bt1_ref[...]
    # Static unroll over the images packed into this grid step (nb is small).
    for i in range(nb):
        cond = cond_ref[i].astype(jnp.bfloat16)                      # (32, thw)
        # Stage 1 (both branches in one MXU pass): h = leaky_relu(W0 @ cond + b0)
        h = jnp.dot(w0, cond, preferred_element_type=jnp.float32) + b0
        h = jnp.where(h >= 0.0, h, 0.01 * h).astype(jnp.bfloat16)    # (64, thw)
        # Stage 2, split per branch -- no 128 x thw intermediate ever built.
        scale = jnp.dot(ws1, h[:c_hidden], preferred_element_type=jnp.float32) + bs1
        shift = jnp.dot(wt1, h[c_hidden:], preferred_element_type=jnp.float32) + bt1
        # Fused SFT modulation: out = fea * scale + shift
        o_ref[i] = (fea_ref[i] * scale + shift).astype(o_ref.dtype)


# ------------------------------ wrapper ------------------------------------

def _choose_spatial_tile(hw, cap_lanes):
    """Pick (hwp, thw): thw is a multiple of 128, thw | hwp, padding <= 128*(ntiles-1)."""
    m = _round_up(hw, 128) // 128            # number of 128-lane blocks needed
    cap = max(1, cap_lanes // 128)
    ntiles = -(-m // cap)                    # spatial tiles per image
    thw = 128 * (-(-m // ntiles))            # near-equal split, <= cap_lanes
    return thw * ntiles, thw


def sft_layer_forward(params, fea_nchw, cond_nchw, *, tile_lanes=8192, max_nb=8):
    """fea_nchw: (N, 64, H, W) f32; cond_nchw: (N, 32, H, W) f32 -> (N, 64, H, W) f32."""
    n, c_fea, h, w = fea_nchw.shape
    nc, c_cond, hc, wc = cond_nchw.shape
    assert (nc, hc, wc) == (n, h, w)
    hw = h * w
    c_hidden = params["ws1"].shape[1]

    fea = fea_nchw.reshape(n, c_fea, hw)
    cond = cond_nchw.reshape(n, c_cond, hw)

    # Lane-aligned spatial tiling: thw divides hwp and hwp - hw stays tiny.
    hwp, thw = _choose_spatial_tile(hw, tile_lanes)
    if hwp != hw:
        pad = ((0, 0), (0, 0), (0, hwp - hw))
        fea = jnp.pad(fea, pad)
        cond = jnp.pad(cond, pad)

    # Pack several images into one grid step when the spatial tile is small so
    # the fixed per-step overhead is amortized; keep >= 2 grid steps when
    # possible so both v7x TensorCores get parallel work.
    nb = max(1, min(n, max_nb, tile_lanes // thw))
    while n % nb:
        nb -= 1
    if n > 1 and (n // nb) * (hwp // thw) == 1:
        nb = n // 2
        while n % nb:
            nb -= 1

    # bf16 MXU operands; biases / epilogue stay in f32.
    w0 = params["w0"].astype(jnp.bfloat16)
    ws1 = params["ws1"].astype(jnp.bfloat16)
    wt1 = params["wt1"].astype(jnp.bfloat16)
    b0, bs1, bt1 = params["b0"], params["bs1"], params["bt1"]

    kernel = functools.partial(_sft_layer_kernel, nb=nb, c_hidden=c_hidden)

    flops = 2 * n * hw * (w0.shape[0] * c_cond + 2 * c_fea * c_hidden + c_fea)
    bytes_accessed = 4 * n * hw * (c_cond + 2 * c_fea)

    out = pl.pallas_call(
        kernel,
        out_shape=jax.ShapeDtypeStruct((n, c_fea, hwp), jnp.float32),
        grid=(n // nb, hwp // thw),
        in_specs=[
            pl.BlockSpec((nb, c_cond, thw), lambda b, t: (b, 0, t)),
            pl.BlockSpec((nb, c_fea, thw), lambda b, t: (b, 0, t)),
            pl.BlockSpec(w0.shape, lambda b, t: (0, 0)),
            pl.BlockSpec(b0.shape, lambda b, t: (0, 0)),
            pl.BlockSpec(ws1.shape, lambda b, t: (0, 0)),
            pl.BlockSpec(bs1.shape, lambda b, t: (0, 0)),
            pl.BlockSpec(wt1.shape, lambda b, t: (0, 0)),
            pl.BlockSpec(bt1.shape, lambda b, t: (0, 0)),
        ],
        out_specs=pl.BlockSpec((nb, c_fea, thw), lambda b, t: (b, 0, t)),
        compiler_params=pltpu.CompilerParams(
            dimension_semantics=("parallel", "parallel"),
            vmem_limit_bytes=32 * 1024 * 1024),
        cost_estimate=pl.CostEstimate(
            flops=flops, transcendentals=0, bytes_accessed=bytes_accessed),
    )(cond, fea, w0, b0, ws1, bs1, wt1, bt1)

    if hwp != hw:
        out = out[:, :, :hw]
    return out.reshape(n, c_fea, h, w)


# ------------------------------ parameters ---------------------------------

def make_params(key, c_cond=32, c_hidden=32, c_fea=64):
    ks = jax.random.split(key, 8)

    def conv1x1(kw, kb, cin, cout):
        # PyTorch Conv2d default init: U(-1/sqrt(fan_in), 1/sqrt(fan_in)).
        bound = 1.0 / math.sqrt(cin)
        wgt = jax.random.uniform(kw, (cout, cin), jnp.float32, -bound, bound)
        bia = jax.random.uniform(kb, (cout,), jnp.float32, -bound, bound)
        return wgt, bia

    ws0, bs0 = conv1x1(ks[0], ks[1], c_cond, c_hidden)    # SFT_scale_conv0
    ws1, bs1 = conv1x1(ks[2], ks[3], c_hidden, c_fea)     # SFT_scale_conv1
    wt0, bt0 = conv1x1(ks[4], ks[5], c_cond, c_hidden)    # SFT_shift_conv0
    wt1, bt1 = conv1x1(ks[6], ks[7], c_hidden, c_fea)     # SFT_shift_conv1

    # Merge the two branch-0 convs into one (2*c_hidden, c_cond) weight.
    w0 = jnp.concatenate([ws0, wt0], axis=0)
    b0 = jnp.concatenate([bs0, bt0], axis=0).reshape(-1, 1)

    return {"w0": w0, "b0": b0,
            "ws1": ws1, "bs1": bs1.reshape(-1, 1),
            "wt1": wt1, "bt1": bt1.reshape(-1, 1),
            "raw": (ws0, bs0, ws1, bs1, wt0, bt0, wt1, bt1)}


# ------------------------------ pure-JAX reference --------------------------

def sft_layer_reference(params, fea_nchw, cond_nchw):
    ws0, bs0, ws1, bs1, wt0, bt0, wt1, bt1 = params["raw"]

    def conv1x1(x, wgt, bia):
        y = jnp.einsum("oc,nchw->nohw", wgt, x)
        return y + bia[None, :, None, None]

    def leaky(x):
        return jnp.where(x >= 0.0, x, 0.01 * x)

    scale = conv1x1(leaky(conv1x1(cond_nchw, ws0, bs0)), ws1, bs1)
    shift = conv1x1(leaky(conv1x1(cond_nchw, wt0, bt0)), wt1, bt1)
    return fea_nchw * scale + shift


# ------------------------------ main ----------------------------------------

if __name__ == "__main__":
    key = jax.random.PRNGKey(0)
    kp, k0, k1 = jax.random.split(key, 3)
    params = make_params(kp)

    # x[0]: features (N, 64, H, W); x[1]: condition (N, 32, H, W) -- NCHW, like PyTorch.
    fea = jax.random.normal(k0, (2, 64, 16, 16), jnp.float32)
    cond = jax.random.normal(k1, (2, 32, 16, 16), jnp.float32)

    out = sft_layer_forward(params, fea, cond)
    out = jax.block_until_ready(out)

    assert out.shape == (2, 64, 16, 16)
    assert bool(jnp.all(jnp.isfinite(out)))

    ref = sft_layer_reference(params, fea, cond)
    max_err = float(jnp.max(jnp.abs(out - ref)))
    # Tolerance covers the bf16 MXU operands (f32 accumulation/epilogue).
    assert max_err < 5e-2, f"max abs err {max_err}"

    print("KERNEL_OK")
</pallas_src>

<mosaic_0001>
module attributes {stable_mosaic.version = 11 : i64} {
  func.func @_sft_layer_kernel(%arg0: i32, %arg1: i32, %arg2: memref<1x32x256xf32, #tpu.memory_space<vmem>>, %arg3: memref<1x64x256xf32, #tpu.memory_space<vmem>>, %arg4: memref<64x32xbf16, #tpu.memory_space<vmem>>, %arg5: memref<64x1xf32, #tpu.memory_space<vmem>>, %arg6: memref<64x32xbf16, #tpu.memory_space<vmem>>, %arg7: memref<64x1xf32, #tpu.memory_space<vmem>>, %arg8: memref<64x32xbf16, #tpu.memory_space<vmem>>, %arg9: memref<64x1xf32, #tpu.memory_space<vmem>>, %arg10: memref<1x64x256xf32, #tpu.memory_space<vmem>>) attributes {dimension_semantics = [#tpu.dimension_semantics<parallel>, #tpu.dimension_semantics<parallel>], iteration_bounds = array<i64: 2, 1>, scalar_prefetch = 0 : i64, scratch_operands = 0 : i64, tpu.core_type = #tpu.core_type<tc>, window_params = [{transform_indices = @transform_0, window_bounds = array<i64: 1, 32, 256>}, {transform_indices = @transform_1, window_bounds = array<i64: 1, 64, 256>}, {pipeline_mode = #tpu.pipeline_mode<synchronous>, transform_indices = @transform_2, window_bounds = array<i64: 64, 32>}, {pipeline_mode = #tpu.pipeline_mode<synchronous>, transform_indices = @transform_3, window_bounds = array<i64: 64, 1>}, {pipeline_mode = #tpu.pipeline_mode<synchronous>, transform_indices = @transform_4, window_bounds = array<i64: 64, 32>}, {pipeline_mode = #tpu.pipeline_mode<synchronous>, transform_indices = @transform_5, window_bounds = array<i64: 64, 1>}, {pipeline_mode = #tpu.pipeline_mode<synchronous>, transform_indices = @transform_6, window_bounds = array<i64: 64, 32>}, {pipeline_mode = #tpu.pipeline_mode<synchronous>, transform_indices = @transform_7, window_bounds = array<i64: 64, 1>}, {transform_indices = @transform_8, window_bounds = array<i64: 1, 64, 256>}]} {
    %c0 = arith.constant 0 : index
    %c0_0 = arith.constant 0 : index
    %0 = vector.load %arg4[%c0, %c0_0] : memref<64x32xbf16, #tpu.memory_space<vmem>>, vector<64x32xbf16>
    %c0_1 = arith.constant 0 : index
    %c0_2 = arith.constant 0 : index
    %1 = vector.load %arg6[%c0_1, %c0_2] : memref<64x32xbf16, #tpu.memory_space<vmem>>, vector<64x32xbf16>
    %c0_3 = arith.constant 0 : index
    %c0_4 = arith.constant 0 : index
    %2 = vector.load %arg8[%c0_3, %c0_4] : memref<64x32xbf16, #tpu.memory_space<vmem>>, vector<64x32xbf16>
    %c0_5 = arith.constant 0 : index
    %c0_6 = arith.constant 0 : index
    %3 = vector.load %arg5[%c0_5, %c0_6] : memref<64x1xf32, #tpu.memory_space<vmem>>, vector<64x1xf32>
    %c0_7 = arith.constant 0 : index
    %c0_8 = arith.constant 0 : index
    %4 = vector.load %arg7[%c0_7, %c0_8] : memref<64x1xf32, #tpu.memory_space<vmem>>, vector<64x1xf32>
    %c0_9 = arith.constant 0 : index
    %c0_10 = arith.constant 0 : index
    %5 = vector.load %arg9[%c0_9, %c0_10] : memref<64x1xf32, #tpu.memory_space<vmem>>, vector<64x1xf32>
    %c0_11 = arith.constant 0 : index
    %c0_12 = arith.constant 0 : index
    %c0_13 = arith.constant 0 : index
    %6 = vector.load %arg2[%c0_11, %c0_12, %c0_13] : memref<1x32x256xf32, #tpu.memory_space<vmem>>, vector<1x32x256xf32>
    %7 = vector.shape_cast %6 : vector<1x32x256xf32> to vector<32x256xf32>
    %8 = arith.truncf %7 : vector<32x256xf32> to vector<32x256xbf16>
    %cst = arith.constant dense<0.000000e+00> : vector<64x256xf32>
    %9 = tpu.matmul %0, %8, %cst {dimension_numbers = #tpu.dot_dimension_numbers<[1], [0], [0], [1], [0, 0, 1, 1], [], []>} : vector<64x32xbf16>, vector<32x256xbf16>, vector<64x256xf32> -> vector<64x256xf32>
    %10 = vector.broadcast %3 : vector<64x1xf32> to vector<64x256xf32>
    %11 = arith.addf %9, %10 : vector<64x256xf32>
    %cst_14 = arith.constant 0.000000e+00 : f32
    %12 = vector.broadcast %cst_14 : f32 to vector<64x256xf32>
    %13 = arith.cmpf oge, %11, %12 : vector<64x256xf32>
    %cst_15 = arith.constant 0.00999999977 : f32
    %14 = vector.broadcast %cst_15 : f32 to vector<64x256xf32>
    %15 = arith.mulf %14, %11 : vector<64x256xf32>
    %16 = arith.select %13, %11, %15 : vector<64x256xi1>, vector<64x256xf32>
    %17 = arith.truncf %16 : vector<64x256xf32> to vector<64x256xbf16>
    %18 = vector.extract_strided_slice %17 {offsets = [0, 0], sizes = [32, 256], strides = [1, 1]} : vector<64x256xbf16> to vector<32x256xbf16>
    %cst_16 = arith.constant dense<0.000000e+00> : vector<64x256xf32>
    %19 = tpu.matmul %1, %18, %cst_16 {dimension_numbers = #tpu.dot_dimension_numbers<[1], [0], [0], [1], [0, 0, 1, 1], [], []>} : vector<64x32xbf16>, vector<32x256xbf16>, vector<64x256xf32> -> vector<64x256xf32>
    %20 = vector.broadcast %4 : vector<64x1xf32> to vector<64x256xf32>
    %21 = arith.addf %19, %20 : vector<64x256xf32>
    %22 = vector.extract_strided_slice %17 {offsets = [32, 0], sizes = [32, 256], strides = [1, 1]} : vector<64x256xbf16> to vector<32x256xbf16>
    %cst_17 = arith.constant dense<0.000000e+00> : vector<64x256xf32>
    %23 = tpu.matmul %2, %22, %cst_17 {dimension_numbers = #tpu.dot_dimension_numbers<[1], [0], [0], [1], [0, 0, 1, 1], [], []>} : vector<64x32xbf16>, vector<32x256xbf16>, vector<64x256xf32> -> vector<64x256xf32>
    %24 = vector.broadcast %5 : vector<64x1xf32> to vector<64x256xf32>
    %25 = arith.addf %23, %24 : vector<64x256xf32>
    %c0_18 = arith.constant 0 : index
    %c0_19 = arith.constant 0 : index
    %c0_20 = arith.constant 0 : index
    %26 = vector.load %arg3[%c0_18, %c0_19, %c0_20] : memref<1x64x256xf32, #tpu.memory_space<vmem>>, vector<1x64x256xf32>
    %27 = vector.shape_cast %26 : vector<1x64x256xf32> to vector<64x256xf32>
    %28 = arith.mulf %27, %21 : vector<64x256xf32>
    %29 = arith.addf %28, %25 : vector<64x256xf32>
    %c0_21 = arith.constant 0 : index
    %c0_22 = arith.constant 0 : index
    %c0_23 = arith.constant 0 : index
    %30 = vector.load %arg10[%c0_21, %c0_22, %c0_23] : memref<1x64x256xf32, #tpu.memory_space<vmem>>, vector<1x64x256xf32>
    %31 = vector.shape_cast %30 : vector<1x64x256xf32> to vector<64x256xf32>
    %32 = vector.shape_cast %29 : vector<64x256xf32> to vector<1x64x256xf32>
    tpu.vector_store %arg10[%c0_21, %c0_22, %c0_23], %32 {strides = array<i32>} : memref<1x64x256xf32, #tpu.memory_space<vmem>>, vector<1x64x256xf32>,
    return
  }
  func.func @transform_0(%arg0: i32, %arg1: i32) -> (i32, i32, i32) {
    %c0_i32 = arith.constant 0 : i32
    %c0_i32_0 = arith.constant 0 : i32
    return %arg0, %c0_i32, %arg1 : i32, i32, i32
  }
  func.func @transform_1(%arg0: i32, %arg1: i32) -> (i32, i32, i32) {
    %c0_i32 = arith.constant 0 : i32
    %c0_i32_0 = arith.constant 0 : i32
    return %arg0, %c0_i32, %arg1 : i32, i32, i32
  }
  func.func @transform_2(%arg0: i32, %arg1: i32) -> (i32, i32) {
    %c0_i32 = arith.constant 0 : i32
    %c0_i32_0 = arith.constant 0 : i32
    %c0_i32_1 = arith.constant 0 : i32
    return %c0_i32, %c0_i32_0 : i32, i32
  }
  func.func @transform_3(%arg0: i32, %arg1: i32) -> (i32, i32) {
    %c0_i32 = arith.constant 0 : i32
    %c0_i32_0 = arith.constant 0 : i32
    %c0_i32_1 = arith.constant 0 : i32
    return %c0_i32, %c0_i32_0 : i32, i32
  }
  func.func @transform_4(%arg0: i32, %arg1: i32) -> (i32, i32) {
    %c0_i32 = arith.constant 0 : i32
    %c0_i32_0 = arith.constant 0 : i32
    %c0_i32_1 = arith.constant 0 : i32
    return %c0_i32, %c0_i32_0 : i32, i32
  }
  func.func @transform_5(%arg0: i32, %arg1: i32) -> (i32, i32) {
    %c0_i32 = arith.constant 0 : i32
    %c0_i32_0 = arith.constant 0 : i32
    %c0_i32_1 = arith.constant 0 : i32
    return %c0_i32, %c0_i32_0 : i32, i32
  }
  func.func @transform_6(%arg0: i32, %arg1: i32) -> (i32, i32) {
    %c0_i32 = arith.constant 0 : i32
    %c0_i32_0 = arith.constant 0 : i32
    %c0_i32_1 = arith.constant 0 : i32
    return %c0_i32, %c0_i32_0 : i32, i32
  }
  func.func @transform_7(%arg0: i32, %arg1: i32) -> (i32, i32) {
    %c0_i32 = arith.constant 0 : i32
    %c0_i32_0 = arith.constant 0 : i32
    %c0_i32_1 = arith.constant 0 : i32
    return %c0_i32, %c0_i32_0 : i32, i32
  }
  func.func @transform_8(%arg0: i32, %arg1: i32) -> (i32, i32, i32) {
    %c0_i32 = arith.constant 0 : i32
    %c0_i32_0 = arith.constant 0 : i32
    return %arg0, %c0_i32, %arg1 : i32, i32, i32
  }
}

</mosaic_0001>

<llo_original>
// kernel: tpu_custom_call.1
$region0: #{tpu_custom_call.1}
  #allocation0 [shape = 'u32[]', space=smem, size = 0x4, offset = 0x4, fixed_abs, tag = 'smem constant byte address 0x4 - core index']
  #allocation1 [shape = 'u32[144,128]{1,0:T(1,128)}', space=vmem, size = 0x12000, scoped, tag = 'internal scratch']
  %s0 = inlined_call_operand.hbm [shape: f32[2,32,256], index: 0, kind: input, shape index: {}]
  %s1 = inlined_call_operand.vmem [shape: f32[2,64,256], index: 1, kind: input, shape index: {}]
  %s2 = inlined_call_operand.vmem [shape: bf16[64,32], index: 2, kind: input, shape index: {}]
  %s3 = inlined_call_operand.vmem [shape: f32[64,1], index: 3, kind: input, shape index: {}]
  %s4 = inlined_call_operand.vmem [shape: bf16[64,32], index: 4, kind: input, shape index: {}]
  %s5 = inlined_call_operand.vmem [shape: f32[64,1], index: 5, kind: input, shape index: {}]
  %s6 = inlined_call_operand.vmem [shape: bf16[64,32], index: 6, kind: input, shape index: {}]
  %s7 = inlined_call_operand.vmem [shape: f32[64,1], index: 7, kind: input, shape index: {}]
  %s8 = inlined_call_operand.hbm [shape: f32[2,64,256], index: 8, kind: output, shape index: {}]
  %s9 = sld [smem:[#allocation0]]
  $region69: #{tpu_custom_call.1} parent=0
    _
  %s11 = ssub.s32 1, %s9
  %s12 = scalar_select 0, %s11, %s9
  $region1: #{tpu_custom_call.1} parent=0
    #allocation2 [shape = 'u8[65536]{0}', space=vmem, size = 0x10000, scoped, tag = 'input window, operand 0']
    #allocation3 [shape = 's32[2]{0}', space=sflag, size = 0x8, scoped, tag = 'scoped memory for tpu_custom_call.1']
    #allocation4 [shape = 's32[2]{0}', space=sflag, size = 0x8, scoped, tag = 'scoped memory for tpu_custom_call.1']
    #allocation5 [shape = 'u8[131072]{0}', space=vmem, size = 0x20000, scoped, tag = 'output window, operand 0']
    %13 = vsyncpa [#allocation3], 0
    %s14 = scalar_lea.sflag [#allocation3], 1
    %15 = vsyncpa %s14, 0
    %16 = vsyncpa [#allocation4], 0
    %s17 = scalar_lea.sflag [#allocation4], 1
    %18 = vsyncpa %s17, 0
    loop: start=0, step=1, limit=4
    $region2: #{tpu_custom_call.1} parent=1 // loop_pre_header
      _
    $region3: #{tpu_custom_call.1} parent=1 // loop_header
      %s20 = sphi 0, %s24
      %p21 = scmp.ge.s32.totalorder %s20, 4
      %s27 = sphi 0, %s39
      %s28 = sphi 0, %s35
      %s29 = sphi 0, %s27
      %s30 = sphi 0, %s28
      %s31 = sphi 0, %s29
      %s32 = sphi 0, %s30
      %s44 = sphi 0, %s46
      %s47 = sphi 0, %s44
      %s48 = sphi 0, %s47
      %s64 = sphi 0, %s48
      %s72 = sphi 0, %s74
      %s75 = sphi 0, %s72
      %s76 = sphi 0, %s75
      %s92 = sphi 0, %s76
      %s96 = sphi 0, %s96
      %s98 = sphi 0, %s96
      %s99 = sphi 0, %s98
      %s113 = sphi 0, %s99
      %s117 = sphi 0, %s117
      %s119 = sphi 0, %s117
      %s120 = sphi 0, %s119
      %s134 = sphi 0, %s120
      %s138 = sphi 0, %s138
      %s140 = sphi 0, %s138
      %s141 = sphi 0, %s140
      %s155 = sphi 0, %s141
      %s159 = sphi 0, %s159
      %s161 = sphi 0, %s159
      %s162 = sphi 0, %s161
      %s176 = sphi 0, %s162
      %s180 = sphi 0, %s180
      %s182 = sphi 0, %s180
      %s183 = sphi 0, %s182
      %s197 = sphi 0, %s183
      %s201 = sphi 0, %s201
      %s203 = sphi 0, %s201
      %s204 = sphi 0, %s203
      %s218 = sphi 0, %s204
      %s226 = sphi 0, %s228
      %s229 = sphi 0, %s226
      %s230 = sphi 0, %s229
      %s246 = sphi 0, %s230
    $region4: #{tpu_custom_call.1} parent=1 // loop_header_branch
      %23 = sbr.rel (%p21) target = $region8
    $region5: #{tpu_custom_call.1} parent=1 // loop_body
      %s25 = ssub.s32 %s20, 1
      %s26 = ssub.s32 %s20, 2
      %s33 = sadd.s32 1, %s28
      %p34 = scmp.ge.s32.totalorder %s33, 1
      %s35 = scalar_select %p34, 0, %s33
      %s36 = sadd.s32 1, %s27
      %s37 = scalar_select %p34, %s36, %s27
      %p38 = scmp.ge.s32.totalorder %s37, 2
      %s39 = scalar_select %p38, 0, %s37
      %s40 = ssub.s32 %s27, %s39
      %s41 = ssub.s32 %s28, %s35
      %s42 = sor.u32 %s40, %s41
      %p43 = scmp.eq.s32.totalorder %s42, 0
      %s45 = sadd.s32 %s44, 1
      %s46 = scalar_select %p43, %s44, %s45
      %p49 = pneg %p43
      %p50 = scmp.eq.s32.totalorder %s20, 1
      %p51 = por %p49, %p50
      %p52 = scmp.ne.s32.totalorder %s44, %s47
      %p53 = scmp.eq.s32.totalorder %s20, 0
      %p54 = por %p52, %p53
      %p55 = scmp.ne.s32.totalorder %s44, %s47
      %p56 = scmp.eq.s32.totalorder %s25, 1
      %p57 = por %p55, %p56
      %p58 = scmp.ne.s32.totalorder %s47, %s48
      %p59 = scmp.eq.s32.totalorder %s25, 0
      %p60 = por %p58, %p59
      %p61 = scmp.ne.s32.totalorder %s47, %s48
      %p62 = scmp.eq.s32.totalorder %s26, 1
      %p63 = por %p61, %p62
      %p65 = scmp.ne.s32.totalorder %s48, %s64
      %p66 = scmp.eq.s32.totalorder %s26, 0
      %p67 = por %p65, %p66
      %s68 = ssub.s32 %s27, %s39
      %s69 = ssub.s32 %s28, %s35
      %s70 = sor.u32 %s68, %s69
      %p71 = scmp.eq.s32.totalorder %s70, 0
      %s73 = sadd.s32 %s72, 1
      %s74 = scalar_select %p71, %s72, %s73
      %p77 = pneg %p71
      %p78 = scmp.eq.s32.totalorder %s20, 1
      %p79 = por %p77, %p78
      %p80 = scmp.ne.s32.totalorder %s72, %s75
      %p81 = scmp.eq.s32.totalorder %s20, 0
      %p82 = por %p80, %p81
      %p83 = scmp.ne.s32.totalorder %s72, %s75
      %p84 = scmp.eq.s32.totalorder %s25, 1
      %p85 = por %p83, %p84
      %p86 = scmp.ne.s32.totalorder %s75, %s76
      %p87 = scmp.eq.s32.totalorder %s25, 0
      %p88 = por %p86, %p87
      %p89 = scmp.ne.s32.totalorder %s75, %s76
      %p90 = scmp.eq.s32.totalorder %s26, 1
      %p91 = por %p89, %p90
      %p93 = scmp.ne.s32.totalorder %s76, %s92
      %p94 = scmp.eq.s32.totalorder %s26, 0
      %p95 = por %p93, %p94
      %s97 = sadd.s32 %s96, 1
      %p100 = scmp.eq.s32.totalorder %s20, 1
      %p101 = scmp.ne.s32.totalorder %s96, %s98
      %p102 = scmp.eq.s32.totalorder %s20, 0
      %p103 = por %p101, %p102
      %p104 = scmp.ne.s32.totalorder %s96, %s98
      %p105 = scmp.eq.s32.totalorder %s25, 1
      %p106 = por %p104, %p105
      %p107 = scmp.ne.s32.totalorder %s98, %s99
      %p108 = scmp.eq.s32.totalorder %s25, 0
      %p109 = por %p107, %p108
      %p110 = scmp.ne.s32.totalorder %s98, %s99
      %p111 = scmp.eq.s32.totalorder %s26, 1
      %p112 = por %p110, %p111
      %p114 = scmp.ne.s32.totalorder %s99, %s113
      %p115 = scmp.eq.s32.totalorder %s26, 0
      %p116 = por %p114, %p115
      %s118 = sadd.s32 %s117, 1
      %p121 = scmp.eq.s32.totalorder %s20, 1
      %p122 = scmp.ne.s32.totalorder %s117, %s119
      %p123 = scmp.eq.s32.totalorder %s20, 0
      %p124 = por %p122, %p123
      %p125 = scmp.ne.s32.totalorder %s117, %s119
      %p126 = scmp.eq.s32.totalorder %s25, 1
      %p127 = por %p125, %p126
      %p128 = scmp.ne.s32.totalorder %s119, %s120
      %p129 = scmp.eq.s32.totalorder %s25, 0
      %p130 = por %p128, %p129
      %p131 = scmp.ne.s32.totalorder %s119, %s120
      %p132 = scmp.eq.s32.totalorder %s26, 1
      %p133 = por %p131, %p132
      %p135 = scmp.ne.s32.totalorder %s120, %s134
      %p136 = scmp.eq.s32.totalorder %s26, 0
      %p137 = por %p135, %p136
      %s139 = sadd.s32 %s138, 1
      %p142 = scmp.eq.s32.totalorder %s20, 1
      %p143 = scmp.ne.s32.totalorder %s138, %s140
      %p144 = scmp.eq.s32.totalorder %s20, 0
      %p145 = por %p143, %p144
      %p146 = scmp.ne.s32.totalorder %s138, %s140
      %p147 = scmp.eq.s32.totalorder %s25, 1
      %p148 = por %p146, %p147
      %p149 = scmp.ne.s32.totalorder %s140, %s141
      %p150 = scmp.eq.s32.totalorder %s25, 0
      %p151 = por %p149, %p150
      %p152 = scmp.ne.s32.totalorder %s140, %s141
      %p153 = scmp.eq.s32.totalorder %s26, 1
      %p154 = por %p152, %p153
      %p156 = scmp.ne.s32.totalorder %s141, %s155
      %p157 = scmp.eq.s32.totalorder %s26, 0
      %p158 = por %p156, %p157
      %s160 = sadd.s32 %s159, 1
      %p163 = scmp.eq.s32.totalorder %s20, 1
      %p164 = scmp.ne.s32.totalorder %s159, %s161
      %p165 = scmp.eq.s32.totalorder %s20, 0
      %p166 = por %p164, %p165
      %p167 = scmp.ne.s32.totalorder %s159, %s161
      %p168 = scmp.eq.s32.totalorder %s25, 1
      %p169 = por %p167, %p168
      %p170 = scmp.ne.s32.totalorder %s161, %s162
      %p171 = scmp.eq.s32.totalorder %s25, 0
      %p172 = por %p170, %p171
      %p173 = scmp.ne.s32.totalorder %s161, %s162
      %p174 = scmp.eq.s32.totalorder %s26, 1
      %p175 = por %p173, %p174
      %p177 = scmp.ne.s32.totalorder %s162, %s176
      %p178 = scmp.eq.s32.totalorder %s26, 0
      %p179 = por %p177, %p178
      %s181 = sadd.s32 %s180, 1
      %p184 = scmp.eq.s32.totalorder %s20, 1
      %p185 = scmp.ne.s32.totalorder %s180, %s182
      %p186 = scmp.eq.s32.totalorder %s20, 0
      %p187 = por %p185, %p186
      %p188 = scmp.ne.s32.totalorder %s180, %s182
      %p189 = scmp.eq.s32.totalorder %s25, 1
      %p190 = por %p188, %p189
      %p191 = scmp.ne.s32.totalorder %s182, %s183
      %p192 = scmp.eq.s32.totalorder %s25, 0
      %p193 = por %p191, %p192
      %p194 = scmp.ne.s32.totalorder %s182, %s183
      %p195 = scmp.eq.s32.totalorder %s26, 1
      %p196 = por %p194, %p195
      %p198 = scmp.ne.s32.totalorder %s183, %s197
      %p199 = scmp.eq.s32.totalorder %s26, 0
      %p200 = por %p198, %p199
      %s202 = sadd.s32 %s201, 1
      %p205 = scmp.eq.s32.totalorder %s20, 1
      %p206 = scmp.ne.s32.totalorder %s201, %s203
      %p207 = scmp.eq.s32.totalorder %s20, 0
      %p208 = por %p206, %p207
      %p209 = scmp.ne.s32.totalorder %s201, %s203
      %p210 = scmp.eq.s32.totalorder %s25, 1
      %p211 = por %p209, %p210
      %p212 = scmp.ne.s32.totalorder %s203, %s204
      %p213 = scmp.eq.s32.totalorder %s25, 0
      %p214 = por %p212, %p213
      %p215 = scmp.ne.s32.totalorder %s203, %s204
      %p216 = scmp.eq.s32.totalorder %s26, 1
      %p217 = por %p215, %p216
      %p219 = scmp.ne.s32.totalorder %s204, %s218
      %p220 = scmp.eq.s32.totalorder %s26, 0
      %p221 = por %p219, %p220
      %s222 = ssub.s32 %s27, %s39
      %s223 = ssub.s32 %s28, %s35
      %s224 = sor.u32 %s222, %s223
      %p225 = scmp.eq.s32.totalorder %s224, 0
      %s227 = sadd.s32 %s226, 1
      %s228 = scalar_select %p225, %s226, %s227
      %p231 = pneg %p225
      %p232 = scmp.eq.s32.totalorder %s20, 1
      %p233 = por %p231, %p232
      %p234 = scmp.ne.s32.totalorder %s226, %s229
      %p235 = scmp.eq.s32.totalorder %s20, 0
      %p236 = por %p234, %p235
      %p237 = scmp.ne.s32.totalorder %s226, %s229
      %p238 = scmp.eq.s32.totalorder %s25, 1
      %p239 = por %p237, %p238
      %p240 = scmp.ne.s32.totalorder %s229, %s230
      %p241 = scmp.eq.s32.totalorder %s25, 0
      %p242 = por %p240, %p241
      %p243 = scmp.ne.s32.totalorder %s229, %s230
      %p244 = scmp.eq.s32.totalorder %s26, 1
      %p245 = por %p243, %p244
      %p247 = scmp.ne.s32.totalorder %s230, %s246
      %p248 = scmp.eq.s32.totalorder %s26, 0
      %p249 = por %p247, %p248
      %p250 = scmp.le.s32.totalorder 1, %s20
      %p251 = scmp.lt.s32.totalorder %s20, 3
      %p252 = pnand %p250, %p251
      %p253 = pneg %p252
      // Predicated region
      $region9: #{tpu_custom_call.1} parent=5 // pred_check
        _
      $region10: #{tpu_custom_call.1} parent=5 // pred_check_branch
        %255 = sbr.rel (%p252) target = $region12
      $region11: #{tpu_custom_call.1} parent=5 // pred_region
        %s256 = ssub.s32 %s20, 1
        // Predicated region
        $region13: #{tpu_custom_call.1} parent=11 // pred_check
          %p257 = pneg %p109
        $region14: #{tpu_custom_call.1} parent=11 // pred_check_branch
          %259 = sbr.rel (%p257) target = $region16
        $region15: #{tpu_custom_call.1} parent=11 // pred_region
          _
        $region16: #{tpu_custom_call.1} parent=11 // pred_fallthru
          _
        // Predicated region
        $region17: #{tpu_custom_call.1} parent=11 // pred_check
          %p260 = pneg %p130
        $region18: #{tpu_custom_call.1} parent=11 // pred_check_branch
          %262 = sbr.rel (%p260) target = $region20
        $region19: #{tpu_custom_call.1} parent=11 // pred_region
          _
        $region20: #{tpu_custom_call.1} parent=11 // pred_fallthru
          _
        // Predicated region
        $region21: #{tpu_custom_call.1} parent=11 // pred_check
          %p263 = pneg %p151
        $region22: #{tpu_custom_call.1} parent=11 // pred_check_branch
          %265 = sbr.rel (%p263) target = $region24
        $region23: #{tpu_custom_call.1} parent=11 // pred_region
          _
        $region24: #{tpu_custom_call.1} parent=11 // pred_fallthru
          _
        // Predicated region
        $region25: #{tpu_custom_call.1} parent=11 // pred_check
          %p266 = pneg %p172
        $region26: #{tpu_custom_call.1} parent=11 // pred_check_branch
          %268 = sbr.rel (%p266) target = $region28
        $region27: #{tpu_custom_call.1} parent=11 // pred_region
          _
        $region28: #{tpu_custom_call.1} parent=11 // pred_fallthru
          _
        // Predicated region
        $region29: #{tpu_custom_call.1} parent=11 // pred_check
          %p269 = pneg %p193
        $region30: #{tpu_custom_call.1} parent=11 // pred_check_branch
          %271 = sbr.rel (%p269) target = $region32
        $region31: #{tpu_custom_call.1} parent=11 // pred_region
          _
        $region32: #{tpu_custom_call.1} parent=11 // pred_fallthru
          _
        // Predicated region
        $region33: #{tpu_custom_call.1} parent=11 // pred_check
          %p272 = pneg %p214
        $region34: #{tpu_custom_call.1} parent=11 // pred_check_branch
          %274 = sbr.rel (%p272) target = $region36
        $region35: #{tpu_custom_call.1} parent=11 // pred_region
          _
        $region36: #{tpu_custom_call.1} parent=11 // pred_fallthru
          _
      $region12: #{tpu_custom_call.1} parent=5 // pred_fallthru
        _
      %p275 = scmp.lt.s32.totalorder %s20, 2
      // Predicated region
      $region37: #{tpu_custom_call.1} parent=5 // pred_check
        %p276 = pneg %p275
      $region38: #{tpu_custom_call.1} parent=5 // pred_check_branch
        %278 = sbr.rel (%p276) target = $region40
      $region39: #{tpu_custom_call.1} parent=5 // pred_region
        // Predicated region
        $region41: #{tpu_custom_call.1} parent=39 // pred_check
          %p279 = pneg %p54
        $region42: #{tpu_custom_call.1} parent=39 // pred_check_branch
          %281 = sbr.rel (%p279) target = $region44
        $region43: #{tpu_custom_call.1} parent=39 // pred_region
          %s282 = sand.u32 %s44, 1
          %s283 = scalar_lea.sflag [#allocation3], %s282
          %s284 = sand.u32 %s44, 1
          %s285 = smul.addr %s284, 64
          %s286 = scalar_lea.vmem [#allocation2], %s285
          %s287 = smul.u32 2, %s28
          %s289 = ssub.s32 1024, 1024
          %290 = vsyncadd %s283, %s289
          %s291 = smul.addr %s27, 8
          %s292 = sadd.s32 %s287, %s291
          %s293 = smul.addr %s292, 128
          %s294 = scalar_lea.hbm %s0, %s293
          %s295 = sshll.u32 %s286, 4
          %s296 = int_to_ptr.vmem [resolvable:$true] %s295
          %301 = dma.hbm_to_vmem [thread:$0]  %s294, 1024, %s296, %s283, 256, 256, 16
        $region44: #{tpu_custom_call.1} parent=39 // pred_fallthru
          _
        // Predicated region
        $region45: #{tpu_custom_call.1} parent=39 // pred_check
          %p302 = pneg %p82
        $region46: #{tpu_custom_call.1} parent=39 // pred_check_branch
          %304 = sbr.rel (%p302) target = $region48
        $region47: #{tpu_custom_call.1} parent=39 // pred_region
          %s305 = smul.u32 2, %s28
          %p306 = scmp.lt.s32.totalorder %s27, 1
          %s307 = scalar_select %p306, %s27, 1
          %p308 = scmp.lt.s32.totalorder %s305, 1
          %s309 = scalar_select %p308, %s305, 1
          %s310 = smul.addr %s307, 16
          %s311 = sadd.s32 %s309, %s310
          %s312 = smul.addr %s311, 8
          %s313 = scalar_lea.vmem %s1, %s312
          %s314 = smul.u32 2, %s28
        $region48: #{tpu_custom_call.1} parent=39 // pred_fallthru
          _
      $region40: #{tpu_custom_call.1} parent=5 // pred_fallthru
        _
      %p315 = scmp.le.s32.totalorder 1, %s20
      %p316 = scmp.lt.s32.totalorder %s20, 3
      %p317 = pnand %p315, %p316
      %p318 = pneg %p317
      // Predicated region
      $region49: #{tpu_custom_call.1} parent=5 // pred_check
        _
      $region50: #{tpu_custom_call.1} parent=5 // pred_check_branch
        %320 = sbr.rel (%p317) target = $region52
      $region51: #{tpu_custom_call.1} parent=5 // pred_region
        %s321 = ssub.s32 %s20, 1
        %s322 = sand.u32 %s47, 1
        %s323 = scalar_lea.sflag [#allocation3], %s322
        %s324 = sand.u32 %s47, 1
        %s325 = smul.addr %s324, 64
        %s326 = scalar_lea.vmem [#allocation2], %s325
        // Predicated region
        $region53: #{tpu_custom_call.1} parent=51 // pred_check
          %p327 = pneg %p60
        $region54: #{tpu_custom_call.1} parent=51 // pred_check_branch
          %329 = sbr.rel (%p327) target = $region56
        $region55: #{tpu_custom_call.1} parent=51 // pred_region
          %330 = dma.done %s323, 1024
        $region56: #{tpu_custom_call.1} parent=51 // pred_fallthru
          _
        %s331 = sand.u32 %s47, 1
        %s332 = scalar_lea.sflag [#allocation3], %s331
        %s333 = sand.u32 %s47, 1
        %s334 = smul.addr %s333, 64
        %s335 = scalar_lea.vmem [#allocation2], %s334
        %p336 = pneg %p60
        %p337 = pneg %p57
        %s338 = smul.u32 2, %s30
        %p339 = scmp.lt.s32.totalorder %s29, 1
        %s340 = scalar_select %p339, %s29, 1
        %p341 = scmp.lt.s32.totalorder %s338, 1
        %s342 = scalar_select %p341, %s338, 1
        %s343 = smul.addr %s340, 16
        %s344 = sadd.s32 %s342, %s343
        %s345 = smul.addr %s344, 8
        %s346 = scalar_lea.vmem %s1, %s345
        %p347 = pneg %p88
        %p348 = pneg %p85
        %p349 = pneg %p109
        %p350 = pneg %p106
        %p351 = pneg %p130
        %p352 = pneg %p127
        %p353 = pneg %p151
        %p354 = pneg %p148
        %p355 = pneg %p172
        %p356 = pneg %p169
        %p357 = pneg %p193
        %p358 = pneg %p190
        %p359 = pneg %p214
        %p360 = pneg %p211
        %p361 = pneg %p242
        %p362 = pneg %p239
        %s363 = sand.u32 %s229, 1
        %s364 = scalar_lea.sflag [#allocation4], %s363
        %s365 = sand.u32 %s229, 1
        %s366 = smul.addr %s365, 128
        %s367 = scalar_lea.vmem [#allocation5], %s366
        %s368 = smul.u32 2, %s30
        %s369 = smul.u32 2, %s30
        %p370 = scmp.lt.s32.totalorder %s29, 1
        %s371 = scalar_select %p370, %s29, 1
        %p372 = scmp.lt.s32.totalorder %s369, 1
        %s373 = scalar_select %p372, %s369, 1
        %s374 = smul.addr %s371, 16
        %s375 = sadd.s32 %s373, %s374
        %s376 = smul.addr %s375, 8
        %s377 = scalar_lea.vmem %s1, %s376
        %s378 = smul.u32 2, %s30
        %s379 = smul.u32 2, %s30
        %v381 = vld [vmem:[%s2] sm:$0xf]
        %v382 = vld [vmem:[%s2 + $0x4] sm:$0xf]
        %v383 = vld [vmem:[%s2 + $0x8] sm:$0xf]
        %v384 = vld [vmem:[%s2 + $0xc] sm:$0xf]
        %v385 = vld [vmem:[%s2 + $0x10] sm:$0xf]
        %v386 = vld [vmem:[%s2 + $0x14] sm:$0xf]
        %v387 = vld [vmem:[%s2 + $0x18] sm:$0xf]
        %v388 = vld [vmem:[%s2 + $0x1c] sm:$0xf]
        %v389 = vld [vmem:[%s4] sm:$0xf]
        %v390 = vld [vmem:[%s4 + $0x4] sm:$0xf]
        %v391 = vld [vmem:[%s4 + $0x8] sm:$0xf]
        %v392 = vld [vmem:[%s4 + $0xc] sm:$0xf]
        %v393 = vld [vmem:[%s4 + $0x10] sm:$0xf]
        %v394 = vld [vmem:[%s4 + $0x14] sm:$0xf]
        %v395 = vld [vmem:[%s4 + $0x18] sm:$0xf]
        %v396 = vld [vmem:[%s4 + $0x1c] sm:$0xf]
        %v397 = vld [vmem:[%s6] sm:$0xf]
        %v398 = vld [vmem:[%s6 + $0x4] sm:$0xf]
        %v399 = vld [vmem:[%s6 + $0x8] sm:$0xf]
        %v400 = vld [vmem:[%s6 + $0xc] sm:$0xf]
        %v401 = vld [vmem:[%s6 + $0x10] sm:$0xf]
        %v402 = vld [vmem:[%s6 + $0x14] sm:$0xf]
        %v403 = vld [vmem:[%s6 + $0x18] sm:$0xf]
        %v404 = vld [vmem:[%s6 + $0x1c] sm:$0xf]
        %v405 = vld [vmem:[%s3] sm:$0xff]
        %v406 = vld [vmem:[%s3 + $0x8] sm:$0xff]
        %v407 = vld [vmem:[%s3 + $0x10] sm:$0xff]
        %v408 = vld [vmem:[%s3 + $0x18] sm:$0xff]
        %v409 = vld [vmem:[%s3 + $0x20] sm:$0xff]
        %v410 = vld [vmem:[%s3 + $0x28] sm:$0xff]
        %v411 = vld [vmem:[%s3 + $0x30] sm:$0xff]
        %v412 = vld [vmem:[%s3 + $0x38] sm:$0xff]
        %v413 = vld [vmem:[%s5] sm:$0xff]
        %v414 = vld [vmem:[%s5 + $0x8] sm:$0xff]
        %v415 = vld [vmem:[%s5 + $0x10] sm:$0xff]
        %v416 = vld [vmem:[%s5 + $0x18] sm:$0xff]
        %v417 = vld [vmem:[%s5 + $0x20] sm:$0xff]
        %v418 = vld [vmem:[%s5 + $0x28] sm:$0xff]
        %v419 = vld [vmem:[%s5 + $0x30] sm:$0xff]
        %v420 = vld [vmem:[%s5 + $0x38] sm:$0xff]
        %v421 = vld [vmem:[%s7] sm:$0xff]
        %v422 = vld [vmem:[%s7 + $0x8] sm:$0xff]
        %v423 = vld [vmem:[%s7 + $0x10] sm:$0xff]
        %v424 = vld [vmem:[%s7 + $0x18] sm:$0xff]
        %v425 = vld [vmem:[%s7 + $0x20] sm:$0xff]
        %v426 = vld [vmem:[%s7 + $0x28] sm:$0xff]
        %v427 = vld [vmem:[%s7 + $0x30] sm:$0xff]
        %v428 = vld [vmem:[%s7 + $0x38] sm:$0xff]
        %v429 = vld [vmem:[%s326] sm:$0xff]
        %v430 = vld [vmem:[%s326 + $0x8] sm:$0xff]
        %v431 = vld [vmem:[%s326 + $0x10] sm:$0xff]
        %v432 = vld [vmem:[%s326 + $0x18] sm:$0xff]
        %v433 = vld [vmem:[%s326 + $0x20] sm:$0xff]
        %v434 = vld [vmem:[%s326 + $0x28] sm:$0xff]
        %v435 = vld [vmem:[%s326 + $0x30] sm:$0xff]
        %v436 = vld [vmem:[%s326 + $0x38] sm:$0xff]
        %v437 = vpack.c.bf16 %v431, %v429
        %v438 = vpack.c.bf16 %v432, %v430
        %v439 = vpack.c.bf16 %v435, %v433
        %v440 = vpack.c.bf16 %v436, %v434
        %442 = vset.pattern.permute.xlu0 0
        %443 = vperm.xlu0 %442, %v405
        %v444 = vpop.permute.xlu0 %443
        %447 = vset.pattern.permute.xlu0 0
        %448 = vperm.xlu0 %447, %v406
        %v449 = vpop.permute.xlu0 %448
        %452 = vset.pattern.permute.xlu0 0
        %453 = vperm.xlu0 %452, %v407
        %v454 = vpop.permute.xlu0 %453
        %457 = vset.pattern.permute.xlu0 0
        %458 = vperm.xlu0 %457, %v408
        %v459 = vpop.permute.xlu0 %458
        %462 = vset.pattern.permute.xlu0 0
        %463 = vperm.xlu0 %462, %v409
        %v464 = vpop.permute.xlu0 %463
        %467 = vset.pattern.permute.xlu0 0
        %468 = vperm.xlu0 %467, %v410
        %v469 = vpop.permute.xlu0 %468
        %472 = vset.pattern.permute.xlu0 0
        %473 = vperm.xlu0 %472, %v411
        %v474 = vpop.permute.xlu0 %473
        %477 = vset.pattern.permute.xlu0 0
        %478 = vperm.xlu0 %477, %v412
        %v479 = vpop.permute.xlu0 %478
        %v489 = vunpack.c.l.b16 %v381
        %v490 = vunpack.c.l.b16 %v382
        %v491 = vunpack.c.l.b16 %v383
        %v492 = vunpack.c.l.b16 %v384
        %v493 = vunpack.c.l.b16 %v385
        %v494 = vunpack.c.l.b16 %v386
        %v495 = vunpack.c.l.b16 %v387
        %v496 = vunpack.c.l.b16 %v388
        %v497 = vpack.c.b16 %v490, %v489
        %v498 = vpack.c.b16 %v492, %v491
        %v499 = vpack.c.b16 %v494, %v493
        %v500 = vpack.c.b16 %v496, %v495
        %vm501 = vcmask 261120
        %v503 = vsel %vm501, %v497, 0
        %v506 = vsel %vm501, %v498, 0
        %v509 = vsel %vm501, %v499, 0
        %v512 = vsel %vm501, %v500, 0
        %514 = vmatprep.subr.bf16.mxu0 %v438
        %515 = vmatpush1.bf16.msra.mxu0 %v437
        %516 = vmatprep.subr.bf16.mxu0 %v440
        %517 = vmatpush1.bf16.msra.mxu0 %v439
        %518 = vmatprep.subr.bf16.mxu0 0
        %519 = vmatpush1.bf16.msra.mxu0 0
        %520 = vmatprep.subr.bf16.mxu0 0
        %521 = vmatpush1.bf16.msra.mxu0 0
        %522 = vmatprep.subr.bf16.mxu0 0
        %523 = vmatpush1.bf16.msra.mxu0 0
        %524 = vmatprep.subr.bf16.mxu0 0
        %525 = vmatpush1.bf16.msra.mxu0 0
        %526 = vmatprep.subr.bf16.mxu0 0
        %527 = vmatpush1.bf16.msra.mxu0 0
        %528 = vmatprep.subr.bf16.mxu0 0
        %529 = vmatpush1.bf16.msra.mxu0 0
        %530 = vmatprep.subr.bf16.mxu0 0
        %531 = vmatpush1.bf16.msra.mxu0 0
        %532 = vmatprep.subr.bf16.mxu0 0
        %533 = vmatpush1.bf16.msra.mxu0 0
        %534 = vmatprep.subr.bf16.mxu0 0
        %535 = vmatpush1.bf16.msra.mxu0 0
        %536 = vmatprep.subr.bf16.mxu0 0
        %537 = vmatpush1.bf16.msra.mxu0 0
        %538 = vmatprep.subr.bf16.mxu0 0
        %539 = vmatpush1.bf16.msra.mxu0 0
        %540 = vmatprep.subr.bf16.mxu0 0
        %541 = vmatpush1.bf16.msra.mxu0 0
        %542 = vmatprep.subr.bf16.mxu0 0
        %543 = vmatpush1.bf16.msra.mxu0 0
        %544 = vmatprep.subr.bf16.mxu0 0
        %545 = vmatpush1.bf16.msra.mxu0 0
        %546 = vmatprep.mubr.bf16.mxu0 0
        %547 = vmatmul.mubr.bf16.gmra.mrb[0].mxu0 %v503
        %v548 = vpop.f32.mrb[0].mxu0
        %v549 = vadd.f32 %v444, %v548
        %v550 = vpop.f32.mrb[0].mxu0
        %v551 = vadd.f32 %v444, %v550
        %v552 = vpop.f32.mrb[0].mxu0
        %v553 = vadd.f32 %v449, %v552
        %v554 = vpop.f32.mrb[0].mxu0
        %v555 = vadd.f32 %v449, %v554
        %556 = vmatprep.mubr.bf16.mxu0 0
        %557 = vmatmul.mubr.bf16.gmra.mrb[0].mxu0 %v506
        %v558 = vpop.f32.mrb[0].mxu0
        %v559 = vadd.f32 %v454, %v558
        %v560 = vpop.f32.mrb[0].mxu0
        %v561 = vadd.f32 %v454, %v560
        %v562 = vpop.f32.mrb[0].mxu0
        %v563 = vadd.f32 %v459, %v562
        %v564 = vpop.f32.mrb[0].mxu0
        %v565 = vadd.f32 %v459, %v564
        %566 = vmatprep.mubr.bf16.mxu0 0
        %567 = vmatmul.mubr.bf16.gmra.mrb[0].mxu0 %v509
        %v568 = vpop.f32.mrb[0].mxu0
        %v569 = vadd.f32 %v464, %v568
        %v570 = vpop.f32.mrb[0].mxu0
        %v571 = vadd.f32 %v464, %v570
        %v572 = vpop.f32.mrb[0].mxu0
        %v573 = vadd.f32 %v469, %v572
        %v574 = vpop.f32.mrb[0].mxu0
        %v575 = vadd.f32 %v469, %v574
        %576 = vmatprep.mubr.bf16.mxu0 0
        %577 = vmatmul.mubr.bf16.gmra.mrb[0].mxu0 %v512
        %v578 = vpop.f32.mrb[0].mxu0
        %v579 = vadd.f32 %v474, %v578
        %v580 = vpop.f32.mrb[0].mxu0
        %v581 = vadd.f32 %v474, %v580
        %v582 = vpop.f32.mrb[0].mxu0
        %v583 = vadd.f32 %v479, %v582
        %v584 = vpop.f32.mrb[0].mxu0
        %v585 = vadd.f32 %v479, %v584
        %586 = vdwg.mxu0
        %vm587 = vcmp.ge.f32.partialorder %v549, 0.0
        %vm588 = vcmp.ge.f32.partialorder %v551, 0.0
        %vm589 = vcmp.ge.f32.partialorder %v553, 0.0
        %vm590 = vcmp.ge.f32.partialorder %v555, 0.0
        %vm591 = vcmp.ge.f32.partialorder %v559, 0.0
        %vm592 = vcmp.ge.f32.partialorder %v561, 0.0
        %vm593 = vcmp.ge.f32.partialorder %v563, 0.0
        %vm594 = vcmp.ge.f32.partialorder %v565, 0.0
        %vm595 = vcmp.ge.f32.partialorder %v569, 0.0
        %vm596 = vcmp.ge.f32.partialorder %v571, 0.0
        %vm597 = vcmp.ge.f32.partialorder %v573, 0.0
        %vm598 = vcmp.ge.f32.partialorder %v575, 0.0
        %vm599 = vcmp.ge.f32.partialorder %v579, 0.0
        %vm600 = vcmp.ge.f32.partialorder %v581, 0.0
        %vm601 = vcmp.ge.f32.partialorder %v583, 0.0
        %vm602 = vcmp.ge.f32.partialorder %v585, 0.0
        %v603 = vmul.f32 %v549, 0.01
        %v604 = vmul.f32 %v551, 0.01
        %v605 = vmul.f32 %v553, 0.01
        %v606 = vmul.f32 %v555, 0.01
        %v607 = vmul.f32 %v559, 0.01
        %v608 = vmul.f32 %v561, 0.01
        %v609 = vmul.f32 %v563, 0.01
        %v610 = vmul.f32 %v565, 0.01
        %v611 = vmul.f32 %v569, 0.01
        %v612 = vmul.f32 %v571, 0.01
        %v613 = vmul.f32 %v573, 0.01
        %v614 = vmul.f32 %v575, 0.01
        %v615 = vmul.f32 %v579, 0.01
        %v616 = vmul.f32 %v581, 0.01
        %v617 = vmul.f32 %v583, 0.01
        %v618 = vmul.f32 %v585, 0.01
        %v619 = vsel %vm587, %v549, %v603
        %v620 = vsel %vm588, %v551, %v604
        %v621 = vsel %vm589, %v553, %v605
        %v622 = vsel %vm590, %v555, %v606
        %v623 = vsel %vm591, %v559, %v607
        %v624 = vsel %vm592, %v561, %v608
        %v625 = vsel %vm593, %v563, %v609
        %v626 = vsel %vm594, %v565, %v610
        %v627 = vsel %vm595, %v569, %v611
        %v628 = vsel %vm596, %v571, %v612
        %v629 = vsel %vm597, %v573, %v613
        %v630 = vsel %vm598, %v575, %v614
        %v631 = vsel %vm599, %v579, %v615
        %v632 = vsel %vm600, %v581, %v616
        %v633 = vsel %vm601, %v583, %v617
        %v634 = vsel %vm602, %v585, %v618
        %v635 = vpack.c.bf16 %v621, %v619
        %v636 = vpack.c.bf16 %v622, %v620
        %v637 = vpack.c.bf16 %v625, %v623
        %v638 = vpack.c.bf16 %v626, %v624
        %v639 = vpack.c.bf16 %v629, %v627
        %v640 = vpack.c.bf16 %v630, %v628
        %v641 = vpack.c.bf16 %v633, %v631
        %v642 = vpack.c.bf16 %v634, %v632
        %644 = vset.pattern.permute.xlu0 0
        %645 = vperm.xlu0 %644, %v413
        %v646 = vpop.permute.xlu0 %645
        %649 = vset.pattern.permute.xlu0 0
        %650 = vperm.xlu0 %649, %v414
        %v651 = vpop.permute.xlu0 %650
        %654 = vset.pattern.permute.xlu0 0
        %655 = vperm.xlu0 %654, %v415
        %v656 = vpop.permute.xlu0 %655
        %659 = vset.pattern.permute.xlu0 0
        %660 = vperm.xlu0 %659, %v416
        %v661 = vpop.permute.xlu0 %660
        %664 = vset.pattern.permute.xlu0 0
        %665 = vperm.xlu0 %664, %v417
        %v666 = vpop.permute.xlu0 %665
        %669 = vset.pattern.permute.xlu0 0
        %670 = vperm.xlu0 %669, %v418
        %v671 = vpop.permute.xlu0 %670
        %674 = vset.pattern.permute.xlu0 0
        %675 = vperm.xlu0 %674, %v419
        %v676 = vpop.permute.xlu0 %675
        %679 = vset.pattern.permute.xlu0 0
        %680 = vperm.xlu0 %679, %v420
        %v681 = vpop.permute.xlu0 %680
        %v691 = vunpack.c.l.b16 %v389
        %v692 = vunpack.c.l.b16 %v390
        %v693 = vunpack.c.l.b16 %v391
        %v694 = vunpack.c.l.b16 %v392
        %v695 = vunpack.c.l.b16 %v393
        %v696 = vunpack.c.l.b16 %v394
        %v697 = vunpack.c.l.b16 %v395
        %v698 = vunpack.c.l.b16 %v396
        %v699 = vpack.c.b16 %v692, %v691
        %v700 = vpack.c.b16 %v694, %v693
        %v701 = vpack.c.b16 %v696, %v695
        %v702 = vpack.c.b16 %v698, %v697
        %v704 = vsel %vm501, %v699, 0
        %v707 = vsel %vm501, %v700, 0
        %v710 = vsel %vm501, %v701, 0
        %v713 = vsel %vm501, %v702, 0
        %715 = vmatprep.subr.bf16.mxu0 %v636
        %716 = vmatpush1.bf16.msra.mxu0 %v635
        %717 = vmatprep.subr.bf16.mxu0 %v638
        %718 = vmatpush1.bf16.msra.mxu0 %v637
        %719 = vmatprep.subr.bf16.mxu0 0
        %720 = vmatpush1.bf16.msra.mxu0 0
        %721 = vmatprep.subr.bf16.mxu0 0
        %722 = vmatpush1.bf16.msra.mxu0 0
        %723 = vmatprep.subr.bf16.mxu0 0
        %724 = vmatpush1.bf16.msra.mxu0 0
        %725 = vmatprep.subr.bf16.mxu0 0
        %726 = vmatpush1.bf16.msra.mxu0 0
        %727 = vmatprep.subr.bf16.mxu0 0
        %728 = vmatpush1.bf16.msra.mxu0 0
        %729 = vmatprep.subr.bf16.mxu0 0
        %730 = vmatpush1.bf16.msra.mxu0 0
        %731 = vmatprep.subr.bf16.mxu0 0
        %732 = vmatpush1.bf16.msra.mxu0 0
        %733 = vmatprep.subr.bf16.mxu0 0
        %734 = vmatpush1.bf16.msra.mxu0 0
        %735 = vmatprep.subr.bf16.mxu0 0
        %736 = vmatpush1.bf16.msra.mxu0 0
        %737 = vmatprep.subr.bf16.mxu0 0
        %738 = vmatpush1.bf16.msra.mxu0 0
        %739 = vmatprep.subr.bf16.mxu0 0
        %740 = vmatpush1.bf16.msra.mxu0 0
        %741 = vmatprep.subr.bf16.mxu0 0
        %742 = vmatpush1.bf16.msra.mxu0 0
        %743 = vmatprep.subr.bf16.mxu0 0
        %744 = vmatpush1.bf16.msra.mxu0 0
        %745 = vmatprep.subr.bf16.mxu0 0
        %746 = vmatpush1.bf16.msra.mxu0 0
        %747 = vmatprep.mubr.bf16.mxu0 0
        %748 = vmatmul.mubr.bf16.gmra.mrb[0].mxu0 %v704
        %v749 = vpop.f32.mrb[0].mxu0
        %v750 = vadd.f32 %v646, %v749
        %v751 = vpop.f32.mrb[0].mxu0
        %v752 = vadd.f32 %v646, %v751
        %v753 = vpop.f32.mrb[0].mxu0
        %v754 = vadd.f32 %v651, %v753
        %v755 = vpop.f32.mrb[0].mxu0
        %v756 = vadd.f32 %v651, %v755
        %757 = vmatprep.mubr.bf16.mxu0 0
        %758 = vmatmul.mubr.bf16.gmra.mrb[0].mxu0 %v707
        %v759 = vpop.f32.mrb[0].mxu0
        %v760 = vadd.f32 %v656, %v759
        %v761 = vpop.f32.mrb[0].mxu0
        %v762 = vadd.f32 %v656, %v761
        %v763 = vpop.f32.mrb[0].mxu0
        %v764 = vadd.f32 %v661, %v763
        %v765 = vpop.f32.mrb[0].mxu0
        %v766 = vadd.f32 %v661, %v765
        %767 = vmatprep.mubr.bf16.mxu0 0
        %768 = vmatmul.mubr.bf16.gmra.mrb[0].mxu0 %v710
        %v769 = vpop.f32.mrb[0].mxu0
        %v770 = vadd.f32 %v666, %v769
        %v771 = vpop.f32.mrb[0].mxu0
        %v772 = vadd.f32 %v666, %v771
        %v773 = vpop.f32.mrb[0].mxu0
        %v774 = vadd.f32 %v671, %v773
        %v775 = vpop.f32.mrb[0].mxu0
        %v776 = vadd.f32 %v671, %v775
        %777 = vmatprep.mubr.bf16.mxu0 0
        %778 = vmatmul.mubr.bf16.gmra.mrb[0].mxu0 %v713
        %v779 = vpop.f32.mrb[0].mxu0
        %v780 = vadd.f32 %v676, %v779
        %v781 = vpop.f32.mrb[0].mxu0
        %v782 = vadd.f32 %v676, %v781
        %v783 = vpop.f32.mrb[0].mxu0
        %v784 = vadd.f32 %v681, %v783
        %v785 = vpop.f32.mrb[0].mxu0
        %v786 = vadd.f32 %v681, %v785
        %787 = vdwg.mxu0
        %789 = vset.pattern.permute.xlu0 0
        %790 = vperm.xlu0 %789, %v421
        %v791 = vpop.permute.xlu0 %790
        %794 = vset.pattern.permute.xlu0 0
        %795 = vperm.xlu0 %794, %v422
        %v796 = vpop.permute.xlu0 %795
        %799 = vset.pattern.permute.xlu0 0
        %800 = vperm.xlu0 %799, %v423
        %v801 = vpop.permute.xlu0 %800
        %804 = vset.pattern.permute.xlu0 0
        %805 = vperm.xlu0 %804, %v424
        %v806 = vpop.permute.xlu0 %805
        %809 = vset.pattern.permute.xlu0 0
        %810 = vperm.xlu0 %809, %v425
        %v811 = vpop.permute.xlu0 %810
        %814 = vset.pattern.permute.xlu0 0
        %815 = vperm.xlu0 %814, %v426
        %v816 = vpop.permute.xlu0 %815
        %819 = vset.pattern.permute.xlu0 0
        %820 = vperm.xlu0 %819, %v427
        %v821 = vpop.permute.xlu0 %820
        %824 = vset.pattern.permute.xlu0 0
        %825 = vperm.xlu0 %824, %v428
        %v826 = vpop.permute.xlu0 %825
        %v836 = vunpack.c.l.b16 %v397
        %v837 = vunpack.c.l.b16 %v398
        %v838 = vunpack.c.l.b16 %v399
        %v839 = vunpack.c.l.b16 %v400
        %v840 = vunpack.c.l.b16 %v401
        %v841 = vunpack.c.l.b16 %v402
        %v842 = vunpack.c.l.b16 %v403
        %v843 = vunpack.c.l.b16 %v404
        %v844 = vpack.c.b16 %v837, %v836
        %v845 = vpack.c.b16 %v839, %v838
        %v846 = vpack.c.b16 %v841, %v840
        %v847 = vpack.c.b16 %v843, %v842
        %v849 = vsel %vm501, %v844, 0
        %v852 = vsel %vm501, %v845, 0
        %v855 = vsel %vm501, %v846, 0
        %v858 = vsel %vm501, %v847, 0
        %860 = vmatprep.subr.bf16.mxu0 %v640
        %861 = vmatpush1.bf16.msra.mxu0 %v639
        %862 = vmatprep.subr.bf16.mxu0 %v642
        %863 = vmatpush1.bf16.msra.mxu0 %v641
        %864 = vmatprep.subr.bf16.mxu0 0
        %865 = vmatpush1.bf16.msra.mxu0 0
        %866 = vmatprep.subr.bf16.mxu0 0
        %867 = vmatpush1.bf16.msra.mxu0 0
        %868 = vmatprep.subr.bf16.mxu0 0
        %869 = vmatpush1.bf16.msra.mxu0 0
        %870 = vmatprep.subr.bf16.mxu0 0
        %871 = vmatpush1.bf16.msra.mxu0 0
        %872 = vmatprep.subr.bf16.mxu0 0
        %873 = vmatpush1.bf16.msra.mxu0 0
        %874 = vmatprep.subr.bf16.mxu0 0
        %875 = vmatpush1.bf16.msra.mxu0 0
        %876 = vmatprep.subr.bf16.mxu0 0
        %877 = vmatpush1.bf16.msra.mxu0 0
        %878 = vmatprep.subr.bf16.mxu0 0
        %879 = vmatpush1.bf16.msra.mxu0 0
        %880 = vmatprep.subr.bf16.mxu0 0
        %881 = vmatpush1.bf16.msra.mxu0 0
        %882 = vmatprep.subr.bf16.mxu0 0
        %883 = vmatpush1.bf16.msra.mxu0 0
        %884 = vmatprep.subr.bf16.mxu0 0
        %885 = vmatpush1.bf16.msra.mxu0 0
        %886 = vmatprep.subr.bf16.mxu0 0
        %887 = vmatpush1.bf16.msra.mxu0 0
        %888 = vmatprep.subr.bf16.mxu0 0
        %889 = vmatpush1.bf16.msra.mxu0 0
        %890 = vmatprep.subr.bf16.mxu0 0
        %891 = vmatpush1.bf16.msra.mxu0 0
        %892 = vmatprep.mubr.bf16.mxu0 0
        %893 = vmatmul.mubr.bf16.gmra.mrb[0].mxu0 %v849
        %v894 = vpop.f32.mrb[0].mxu0
        %v895 = vadd.f32 %v791, %v894
        %v896 = vpop.f32.mrb[0].mxu0
        %v897 = vadd.f32 %v791, %v896
        %v898 = vpop.f32.mrb[0].mxu0
        %v899 = vadd.f32 %v796, %v898
        %v900 = vpop.f32.mrb[0].mxu0
        %v901 = vadd.f32 %v796, %v900
        %902 = vmatprep.mubr.bf16.mxu0 0
        %903 = vmatmul.mubr.bf16.gmra.mrb[0].mxu0 %v852
        %v904 = vpop.f32.mrb[0].mxu0
        %v905 = vadd.f32 %v801, %v904
        %v906 = vpop.f32.mrb[0].mxu0
        %v907 = vadd.f32 %v801, %v906
        %v908 = vpop.f32.mrb[0].mxu0
        %v909 = vadd.f32 %v806, %v908
        %v910 = vpop.f32.mrb[0].mxu0
        %v911 = vadd.f32 %v806, %v910
        %912 = vmatprep.mubr.bf16.mxu0 0
        %913 = vmatmul.mubr.bf16.gmra.mrb[0].mxu0 %v855
        %v914 = vpop.f32.mrb[0].mxu0
        %v915 = vadd.f32 %v811, %v914
        %v916 = vpop.f32.mrb[0].mxu0
        %v917 = vadd.f32 %v811, %v916
        %v918 = vpop.f32.mrb[0].mxu0
        %v919 = vadd.f32 %v816, %v918
        %v920 = vpop.f32.mrb[0].mxu0
        %v921 = vadd.f32 %v816, %v920
        %922 = vmatprep.mubr.bf16.mxu0 0
        %923 = vmatmul.mubr.bf16.gmra.mrb[0].mxu0 %v858
        %v924 = vpop.f32.mrb[0].mxu0
        %v925 = vadd.f32 %v821, %v924
        %v926 = vpop.f32.mrb[0].mxu0
        %v927 = vadd.f32 %v821, %v926
        %v928 = vpop.f32.mrb[0].mxu0
        %v929 = vadd.f32 %v826, %v928
        %v930 = vpop.f32.mrb[0].mxu0
        %v931 = vadd.f32 %v826, %v930
        %932 = vdwg.mxu0
        %v933 = vld [vmem:[%s377] sm:$0xff]
        %v934 = vld [vmem:[%s377 + $0x8] sm:$0xff]
        %v935 = vld [vmem:[%s377 + $0x10] sm:$0xff]
        %v936 = vld [vmem:[%s377 + $0x18] sm:$0xff]
        %v937 = vld [vmem:[%s377 + $0x20] sm:$0xff]
        %v938 = vld [vmem:[%s377 + $0x28] sm:$0xff]
        %v939 = vld [vmem:[%s377 + $0x30] sm:$0xff]
        %v940 = vld [vmem:[%s377 + $0x38] sm:$0xff]
        %v941 = vld [vmem:[%s377 + $0x40] sm:$0xff]
        %v942 = vld [vmem:[%s377 + $0x48] sm:$0xff]
        %v943 = vld [vmem:[%s377 + $0x50] sm:$0xff]
        %v944 = vld [vmem:[%s377 + $0x58] sm:$0xff]
        %v945 = vld [vmem:[%s377 + $0x60] sm:$0xff]
        %v946 = vld [vmem:[%s377 + $0x68] sm:$0xff]
        %v947 = vld [vmem:[%s377 + $0x70] sm:$0xff]
        %v948 = vld [vmem:[%s377 + $0x78] sm:$0xff]
        %v949 = vmul.f32 %v933, %v750
        %v950 = vmul.f32 %v934, %v752
        %v951 = vmul.f32 %v935, %v754
        %v952 = vmul.f32 %v936, %v756
        %v953 = vmul.f32 %v937, %v760
        %v954 = vmul.f32 %v938, %v762
        %v955 = vmul.f32 %v939, %v764
        %v956 = vmul.f32 %v940, %v766
        %v957 = vmul.f32 %v941, %v770
        %v958 = vmul.f32 %v942, %v772
        %v959 = vmul.f32 %v943, %v774
        %v960 = vmul.f32 %v944, %v776
        %v961 = vmul.f32 %v945, %v780
        %v962 = vmul.f32 %v946, %v782
        %v963 = vmul.f32 %v947, %v784
        %v964 = vmul.f32 %v948, %v786
        %v965 = vadd.f32 %v949, %v895
        %v966 = vadd.f32 %v950, %v897
        %v967 = vadd.f32 %v951, %v899
        %v968 = vadd.f32 %v952, %v901
        %v969 = vadd.f32 %v953, %v905
        %v970 = vadd.f32 %v954, %v907
        %v971 = vadd.f32 %v955, %v909
        %v972 = vadd.f32 %v956, %v911
        %v973 = vadd.f32 %v957, %v915
        %v974 = vadd.f32 %v958, %v917
        %v975 = vadd.f32 %v959, %v919
        %v976 = vadd.f32 %v960, %v921
        %v977 = vadd.f32 %v961, %v925
        %v978 = vadd.f32 %v962, %v927
        %v979 = vadd.f32 %v963, %v929
        %v980 = vadd.f32 %v964, %v931
        %981 = vst [vmem:[%s367] sm:$0xff] %v965
        %982 = vst [vmem:[%s367 + $0x8] sm:$0xff] %v966
        %983 = vst [vmem:[%s367 + $0x10] sm:$0xff] %v967
        %984 = vst [vmem:[%s367 + $0x18] sm:$0xff] %v968
        %985 = vst [vmem:[%s367 + $0x20] sm:$0xff] %v969
        %986 = vst [vmem:[%s367 + $0x28] sm:$0xff] %v970
        %987 = vst [vmem:[%s367 + $0x30] sm:$0xff] %v971
        %988 = vst [vmem:[%s367 + $0x38] sm:$0xff] %v972
        %989 = vst [vmem:[%s367 + $0x40] sm:$0xff] %v973
        %990 = vst [vmem:[%s367 + $0x48] sm:$0xff] %v974
        %991 = vst [vmem:[%s367 + $0x50] sm:$0xff] %v975
        %992 = vst [vmem:[%s367 + $0x58] sm:$0xff] %v976
        %993 = vst [vmem:[%s367 + $0x60] sm:$0xff] %v977
        %994 = vst [vmem:[%s367 + $0x68] sm:$0xff] %v978
        %995 = vst [vmem:[%s367 + $0x70] sm:$0xff] %v979
        %996 = vst [vmem:[%s367 + $0x78] sm:$0xff] %v980
        %s997 = sand.u32 %s229, 1
        %s998 = scalar_lea.sflag [#allocation4], %s997
        %s999 = sand.u32 %s229, 1
        %s1000 = smul.addr %s999, 128
        %s1001 = scalar_lea.vmem [#allocation5], %s1000
        // Predicated region
        $region57: #{tpu_custom_call.1} parent=51 // pred_check
          %p1002 = pneg %p239
        $region58: #{tpu_custom_call.1} parent=51 // pred_check_branch
          %1004 = sbr.rel (%p1002) target = $region60
        $region59: #{tpu_custom_call.1} parent=51 // pred_region
          %s1005 = smul.u32 2, %s30
          %s1007 = ssub.s32 2048, 2048
          %1008 = vsyncadd %s998, %s1007
          %s1009 = smul.addr %s29, 16
          %s1010 = sadd.s32 %s1005, %s1009
          %s1011 = smul.addr %s1010, 128
          %s1012 = scalar_lea.hbm %s8, %s1011
          %s1013 = sshll.u32 %s1001, 4
          %s1014 = int_to_ptr.vmem [resolvable:$true] %s1013
          %1019 = dma.vmem_to_hbm [thread:$0]  %s1014, 2048, %s1012, %s998, 256, 256, 16
        $region60: #{tpu_custom_call.1} parent=51 // pred_fallthru
          _
      $region52: #{tpu_custom_call.1} parent=5 // pred_fallthru
        _
      %p1020 = scmp.le.s32.totalorder 2, %s20
      // Predicated region
      $region61: #{tpu_custom_call.1} parent=5 // pred_check
        %p1021 = pneg %p1020
      $region62: #{tpu_custom_call.1} parent=5 // pred_check_branch
        %1023 = sbr.rel (%p1021) target = $region64
      $region63: #{tpu_custom_call.1} parent=5 // pred_region
        %s1024 = ssub.s32 %s20, 2
        // Predicated region
        $region65: #{tpu_custom_call.1} parent=63 // pred_check
          %p1025 = pneg %p245
        $region66: #{tpu_custom_call.1} parent=63 // pred_check_branch
          %1027 = sbr.rel (%p1025) target = $region68
        $region67: #{tpu_custom_call.1} parent=63 // pred_region
          %s1028 = sand.u32 %s230, 1
          %s1029 = scalar_lea.sflag [#allocation4], %s1028
          %s1030 = sand.u32 %s230, 1
          %s1031 = smul.addr %s1030, 128
          %s1032 = scalar_lea.vmem [#allocation5], %s1031
          %1033 = dma.done %s1029, 2048
        $region68: #{tpu_custom_call.1} parent=63 // pred_fallthru
          _
      $region64: #{tpu_custom_call.1} parent=5 // pred_fallthru
        _
    $region6: #{tpu_custom_call.1} parent=1 // loop_footer
      %s24 = sadd.s32 1, %s20
    $region7: #{tpu_custom_call.1} parent=1 // loop_footer_branch
      %19 = sbr.rel target = $region3
    $region8: #{tpu_custom_call.1} parent=1 // loop_exit
      _
    %1034 = vsyncpa [#allocation3], 1
    %s1035 = scalar_lea.sflag [#allocation3], 1
    %1036 = vsyncpa %s1035, 1
    %1037 = vsyncpa [#allocation4], 1
    %s1038 = scalar_lea.sflag [#allocation4], 1
    %1039 = vsyncpa %s1038, 1

</llo_original>
